<compile_context>
chip_gen: v6e
topology: v6e:2x2x1
jax: 0.10.0
libtpu: 0.0.40
codegen_flags: <defaults>
</compile_context>

<pallas_src>
import functools

import jax
import jax.numpy as jnp
from jax.experimental import pallas as pl
from jax.experimental.pallas import tpu as pltpu

HIDDEN = 64        # logical hidden width (matches the PyTorch module)
HIDDEN_PAD = 128   # lane-dense padded hidden width
LANE = 128         # lane-dense padded action width


def _dqn_kernel(x_ref, w1_ref, b1_ref, w2_ref, b2_ref, w3_ref, b3_ref, o_ref):
    """One batch tile: three MXU matmuls with f32 accumulation, VPU bias+ReLU."""
    compute_dtype = w1_ref.dtype
    x = x_ref[...]

    h1 = jnp.dot(x, w1_ref[...], preferred_element_type=jnp.float32) + b1_ref[...]
    h1 = jnp.maximum(h1, 0.0).astype(compute_dtype)

    h2 = jnp.dot(h1, w2_ref[...], preferred_element_type=jnp.float32) + b2_ref[...]
    h2 = jnp.maximum(h2, 0.0).astype(compute_dtype)

    q = jnp.dot(h2, w3_ref[...], preferred_element_type=jnp.float32) + b3_ref[...]
    o_ref[...] = q.astype(o_ref.dtype)


def init_params(key, dim_states, dim_actions):
    """Mirror PyTorch init: nn.init.uniform_(weight/bias, a=0.0, b=1.0) for every Linear.

    Weights stored as (in_features, out_features) so the kernel computes x @ W + b.
    """
    ks = jax.random.split(key, 6)
    w1 = jax.random.uniform(ks[0], (dim_states, HIDDEN), jnp.float32, 0.0, 1.0)
    b1 = jax.random.uniform(ks[1], (1, HIDDEN), jnp.float32, 0.0, 1.0)
    w2 = jax.random.uniform(ks[2], (HIDDEN, HIDDEN), jnp.float32, 0.0, 1.0)
    b2 = jax.random.uniform(ks[3], (1, HIDDEN), jnp.float32, 0.0, 1.0)
    w3 = jax.random.uniform(ks[4], (HIDDEN, dim_actions), jnp.float32, 0.0, 1.0)
    b3 = jax.random.uniform(ks[5], (1, dim_actions), jnp.float32, 0.0, 1.0)
    return dict(w1=w1, b1=b1, w2=w2, b2=b2, w3=w3, b3=b3)


def _default_use_bf16():
    """bf16 matmul inputs only on chips with a bf16 VPU (v6e / v7x); f32 elsewhere."""
    try:
        kind = jax.devices()[0].device_kind.lower()
    except Exception:
        return False
    return not any(tag in kind for tag in ("v2", "v3", "v4", "v5"))


def prepare_params(params, use_bf16):
    """One-time weight prep: zero-pad to lane-dense 128-wide layout, optional bf16 cast.

    Zero padding is numerically identity; biases stay f32 (bias add / ReLU run on the VPU in f32).
    NOTE: only arrays go in this dict (it is a jit pytree argument) — no Python ints.
    """
    w_dtype = jnp.bfloat16 if use_bf16 else jnp.float32
    w1, b1, w2, b2, w3, b3 = (params[k] for k in ("w1", "b1", "w2", "b2", "w3", "b3"))
    dim_states = w1.shape[0]
    dim_actions = w3.shape[1]

    w1p = jnp.zeros((dim_states, HIDDEN_PAD), jnp.float32).at[:, :HIDDEN].set(w1)
    b1p = jnp.zeros((1, HIDDEN_PAD), jnp.float32).at[:, :HIDDEN].set(b1)
    w2p = jnp.zeros((HIDDEN_PAD, HIDDEN_PAD), jnp.float32).at[:HIDDEN, :HIDDEN].set(w2)
    b2p = jnp.zeros((1, HIDDEN_PAD), jnp.float32).at[:, :HIDDEN].set(b2)
    w3p = jnp.zeros((HIDDEN_PAD, LANE), jnp.float32).at[:HIDDEN, :dim_actions].set(w3)
    b3p = jnp.zeros((1, LANE), jnp.float32).at[:, :dim_actions].set(b3)

    return dict(
        w1=w1p.astype(w_dtype), b1=b1p,
        w2=w2p.astype(w_dtype), b2=b2p,
        w3=w3p.astype(w_dtype), b3=b3p,
    )


@functools.partial(jax.jit, static_argnames=("dim_actions",))
def deep_qnetwork_forward(x, prepared, dim_actions):
    """x: (B, dim_states) float32 -> (B, dim_actions) float32 Q-values."""
    w1, b1, w2, b2, w3, b3 = (prepared[k] for k in ("w1", "b1", "w2", "b2", "w3", "b3"))
    B, S = x.shape
    compute_dtype = w1.dtype
    x = x.astype(compute_dtype)

    # Batch tile: multiple of 8 sublanes, capped so double-buffered tiles stay tiny
    # (safe even under v7x's 64 MiB VMEM).
    if B >= 1024:
        tb = 1024
    else:
        tb = max(8, ((B + 7) // 8) * 8)
    b_pad = ((B + tb - 1) // tb) * tb
    if b_pad != B:
        x = jnp.pad(x, ((0, b_pad - B), (0, 0)))
    grid = (b_pad // tb,)

    itemsize = jnp.dtype(compute_dtype).itemsize
    flops = 2 * b_pad * (S * HIDDEN_PAD + HIDDEN_PAD * HIDDEN_PAD + HIDDEN_PAD * LANE)
    bytes_accessed = (
        b_pad * S * itemsize                                     # x
        + (S + HIDDEN_PAD + HIDDEN_PAD) * HIDDEN_PAD * itemsize  # w1, w2, w3 (w3 cols = LANE)
        + (2 * HIDDEN_PAD + LANE) * 4                            # biases (f32)
        + b_pad * LANE * 4                                       # padded output (f32)
    )

    out = pl.pallas_call(
        _dqn_kernel,
        out_shape=jax.ShapeDtypeStruct((b_pad, LANE), jnp.float32),
        grid=grid,
        in_specs=[
            pl.BlockSpec((tb, S), lambda i: (i, 0)),                 # activations: tiled over batch
            pl.BlockSpec((S, HIDDEN_PAD), lambda i: (0, 0)),         # weights/biases: VMEM-resident
            pl.BlockSpec((1, HIDDEN_PAD), lambda i: (0, 0)),
            pl.BlockSpec((HIDDEN_PAD, HIDDEN_PAD), lambda i: (0, 0)),
            pl.BlockSpec((1, HIDDEN_PAD), lambda i: (0, 0)),
            pl.BlockSpec((HIDDEN_PAD, LANE), lambda i: (0, 0)),
            pl.BlockSpec((1, LANE), lambda i: (0, 0)),
        ],
        out_specs=pl.BlockSpec((tb, LANE), lambda i: (i, 0)),        # lane-dense (128-wide) stores
        compiler_params=pltpu.CompilerParams(
            dimension_semantics=("parallel",),                       # megacore sharding on v7x
        ),
        cost_estimate=pl.CostEstimate(
            flops=flops, transcendentals=0, bytes_accessed=bytes_accessed
        ),
    )(x, w1, b1, w2, b2, w3, b3)

    # B and dim_actions are static Python ints -> static slice.
    return out[:B, :dim_actions]


def _reference_forward(x, p):
    h1 = jnp.maximum(x @ p["w1"] + p["b1"], 0.0)
    h2 = jnp.maximum(h1 @ p["w2"] + p["b2"], 0.0)
    return h2 @ p["w3"] + p["b3"]


if __name__ == "__main__":
    key = jax.random.PRNGKey(0)
    k_param, k_x = jax.random.split(key)

    dim_states = 8      # small state vector (e.g. CartPole-like env)
    dim_actions = 4
    batch = 2

    params = init_params(k_param, dim_states, dim_actions)
    use_bf16 = _default_use_bf16()
    prepared = prepare_params(params, use_bf16)

    x = jax.random.normal(k_x, (batch, dim_states), jnp.float32)

    q = deep_qnetwork_forward(x, prepared, dim_actions=dim_actions)
    q = jax.block_until_ready(q)

    q_ref = _reference_forward(x, params)
    assert q.shape == (batch, dim_actions)
    tol = 2e-2 if use_bf16 else 1e-4
    assert jnp.allclose(q, q_ref, atol=tol, rtol=tol), "mismatch vs reference"

    print("KERNEL_OK")
</pallas_src>

<mosaic_0001>
module attributes {stable_mosaic.version = 11 : i64} {
  func.func @_dqn_kernel(%arg0: i32, %arg1: memref<8x8xbf16, #tpu.memory_space<vmem>>, %arg2: memref<8x128xbf16, #tpu.memory_space<vmem>>, %arg3: memref<1x128xf32, #tpu.memory_space<vmem>>, %arg4: memref<128x128xbf16, #tpu.memory_space<vmem>>, %arg5: memref<1x128xf32, #tpu.memory_space<vmem>>, %arg6: memref<128x128xbf16, #tpu.memory_space<vmem>>, %arg7: memref<1x128xf32, #tpu.memory_space<vmem>>, %arg8: memref<8x128xf32, #tpu.memory_space<vmem>>) attributes {dimension_semantics = [#tpu.dimension_semantics<parallel>], iteration_bounds = array<i64: 1>, scalar_prefetch = 0 : i64, scratch_operands = 0 : i64, tpu.core_type = #tpu.core_type<tc>, window_params = [{transform_indices = @transform_0, window_bounds = array<i64: 8, 8>}, {pipeline_mode = #tpu.pipeline_mode<synchronous>, transform_indices = @transform_1, window_bounds = array<i64: 8, 128>}, {pipeline_mode = #tpu.pipeline_mode<synchronous>, transform_indices = @transform_2, window_bounds = array<i64: 1, 128>}, {pipeline_mode = #tpu.pipeline_mode<synchronous>, transform_indices = @transform_3, window_bounds = array<i64: 128, 128>}, {pipeline_mode = #tpu.pipeline_mode<synchronous>, transform_indices = @transform_4, window_bounds = array<i64: 1, 128>}, {pipeline_mode = #tpu.pipeline_mode<synchronous>, transform_indices = @transform_5, window_bounds = array<i64: 128, 128>}, {pipeline_mode = #tpu.pipeline_mode<synchronous>, transform_indices = @transform_6, window_bounds = array<i64: 1, 128>}, {transform_indices = @transform_7, window_bounds = array<i64: 8, 128>}]} {
    %c0 = arith.constant 0 : index
    %c0_0 = arith.constant 0 : index
    %0 = vector.load %arg1[%c0, %c0_0] : memref<8x8xbf16, #tpu.memory_space<vmem>>, vector<8x8xbf16>
    %c0_1 = arith.constant 0 : index
    %c0_2 = arith.constant 0 : index
    %1 = vector.load %arg2[%c0_1, %c0_2] : memref<8x128xbf16, #tpu.memory_space<vmem>>, vector<8x128xbf16>
    %cst = arith.constant dense<0.000000e+00> : vector<8x128xf32>
    %2 = tpu.matmul %0, %1, %cst {dimension_numbers = #tpu.dot_dimension_numbers<[1], [0], [0], [1], [0, 0, 1, 1], [], []>} : vector<8x8xbf16>, vector<8x128xbf16>, vector<8x128xf32> -> vector<8x128xf32>
    %c0_3 = arith.constant 0 : index
    %c0_4 = arith.constant 0 : index
    %3 = vector.load %arg3[%c0_3, %c0_4] : memref<1x128xf32, #tpu.memory_space<vmem>>, vector<1x128xf32>
    %4 = vector.broadcast %3 : vector<1x128xf32> to vector<8x128xf32>
    %5 = arith.addf %2, %4 : vector<8x128xf32>
    %cst_5 = arith.constant 0.000000e+00 : f32
    %6 = vector.broadcast %cst_5 : f32 to vector<8x128xf32>
    %7 = arith.maximumf %5, %6 : vector<8x128xf32>
    %8 = arith.truncf %7 : vector<8x128xf32> to vector<8x128xbf16>
    %c0_6 = arith.constant 0 : index
    %c0_7 = arith.constant 0 : index
    %9 = vector.load %arg4[%c0_6, %c0_7] : memref<128x128xbf16, #tpu.memory_space<vmem>>, vector<128x128xbf16>
    %cst_8 = arith.constant dense<0.000000e+00> : vector<8x128xf32>
    %10 = tpu.matmul %8, %9, %cst_8 {dimension_numbers = #tpu.dot_dimension_numbers<[1], [0], [0], [1], [0, 0, 1, 1], [], []>} : vector<8x128xbf16>, vector<128x128xbf16>, vector<8x128xf32> -> vector<8x128xf32>
    %c0_9 = arith.constant 0 : index
    %c0_10 = arith.constant 0 : index
    %11 = vector.load %arg5[%c0_9, %c0_10] : memref<1x128xf32, #tpu.memory_space<vmem>>, vector<1x128xf32>
    %12 = vector.broadcast %11 : vector<1x128xf32> to vector<8x128xf32>
    %13 = arith.addf %10, %12 : vector<8x128xf32>
    %cst_11 = arith.constant 0.000000e+00 : f32
    %14 = vector.broadcast %cst_11 : f32 to vector<8x128xf32>
    %15 = arith.maximumf %13, %14 : vector<8x128xf32>
    %16 = arith.truncf %15 : vector<8x128xf32> to vector<8x128xbf16>
    %c0_12 = arith.constant 0 : index
    %c0_13 = arith.constant 0 : index
    %17 = vector.load %arg6[%c0_12, %c0_13] : memref<128x128xbf16, #tpu.memory_space<vmem>>, vector<128x128xbf16>
    %cst_14 = arith.constant dense<0.000000e+00> : vector<8x128xf32>
    %18 = tpu.matmul %16, %17, %cst_14 {dimension_numbers = #tpu.dot_dimension_numbers<[1], [0], [0], [1], [0, 0, 1, 1], [], []>} : vector<8x128xbf16>, vector<128x128xbf16>, vector<8x128xf32> -> vector<8x128xf32>
    %c0_15 = arith.constant 0 : index
    %c0_16 = arith.constant 0 : index
    %19 = vector.load %arg7[%c0_15, %c0_16] : memref<1x128xf32, #tpu.memory_space<vmem>>, vector<1x128xf32>
    %20 = vector.broadcast %19 : vector<1x128xf32> to vector<8x128xf32>
    %21 = arith.addf %18, %20 : vector<8x128xf32>
    %c0_17 = arith.constant 0 : index
    %c0_18 = arith.constant 0 : index
    %22 = vector.load %arg8[%c0_17, %c0_18] : memref<8x128xf32, #tpu.memory_space<vmem>>, vector<8x128xf32>
    tpu.vector_store %arg8[%c0_17, %c0_18], %21 {strides = array<i32>} : memref<8x128xf32, #tpu.memory_space<vmem>>, vector<8x128xf32>,
    return
  }
  func.func @transform_0(%arg0: i32) -> (i32, i32) {
    %c0_i32 = arith.constant 0 : i32
    %c0_i32_0 = arith.constant 0 : i32
    return %arg0, %c0_i32 : i32, i32
  }
  func.func @transform_1(%arg0: i32) -> (i32, i32) {
    %c0_i32 = arith.constant 0 : i32
    %c0_i32_0 = arith.constant 0 : i32
    %c0_i32_1 = arith.constant 0 : i32
    return %c0_i32, %c0_i32_0 : i32, i32
  }
  func.func @transform_2(%arg0: i32) -> (i32, i32) {
    %c0_i32 = arith.constant 0 : i32
    %c0_i32_0 = arith.constant 0 : i32
    %c0_i32_1 = arith.constant 0 : i32
    return %c0_i32, %c0_i32_0 : i32, i32
  }
  func.func @transform_3(%arg0: i32) -> (i32, i32) {
    %c0_i32 = arith.constant 0 : i32
    %c0_i32_0 = arith.constant 0 : i32
    %c0_i32_1 = arith.constant 0 : i32
    return %c0_i32, %c0_i32_0 : i32, i32
  }
  func.func @transform_4(%arg0: i32) -> (i32, i32) {
    %c0_i32 = arith.constant 0 : i32
    %c0_i32_0 = arith.constant 0 : i32
    %c0_i32_1 = arith.constant 0 : i32
    return %c0_i32, %c0_i32_0 : i32, i32
  }
  func.func @transform_5(%arg0: i32) -> (i32, i32) {
    %c0_i32 = arith.constant 0 : i32
    %c0_i32_0 = arith.constant 0 : i32
    %c0_i32_1 = arith.constant 0 : i32
    return %c0_i32, %c0_i32_0 : i32, i32
  }
  func.func @transform_6(%arg0: i32) -> (i32, i32) {
    %c0_i32 = arith.constant 0 : i32
    %c0_i32_0 = arith.constant 0 : i32
    %c0_i32_1 = arith.constant 0 : i32
    return %c0_i32, %c0_i32_0 : i32, i32
  }
  func.func @transform_7(%arg0: i32) -> (i32, i32) {
    %c0_i32 = arith.constant 0 : i32
    %c0_i32_0 = arith.constant 0 : i32
    return %arg0, %c0_i32 : i32, i32
  }
}

</mosaic_0001>

<llo_original>
// kernel: deep_qnetwork_forward.1
$region0: #{deep_qnetwork_forward.1}
  #allocation0 [shape = 'u32[]', space=smem, size = 0x4, offset = 0x4, fixed_abs, tag = 'smem constant byte address 0x4 - core index']
  #allocation1 [shape = 'u32[144,128]{1,0:T(1,128)}', space=vmem, size = 0x12000, scoped, tag = 'internal scratch']
  %s0 = inlined_call_operand.vmem [shape: bf16[8,8], index: 0, kind: input, shape index: {}]
  %s1 = inlined_call_operand.vmem [shape: bf16[8,128], index: 1, kind: input, shape index: {}]
  %s2 = inlined_call_operand.vmem [shape: f32[1,128], index: 2, kind: input, shape index: {}]
  %s3 = inlined_call_operand.hbm [shape: bf16[128,128], index: 3, kind: input, shape index: {}]
  %s4 = inlined_call_operand.vmem [shape: f32[1,128], index: 4, kind: input, shape index: {}]
  %s5 = inlined_call_operand.hbm [shape: bf16[128,128], index: 5, kind: input, shape index: {}]
  %s6 = inlined_call_operand.vmem [shape: f32[1,128], index: 6, kind: input, shape index: {}]
  %s7 = inlined_call_operand.vmem [shape: f32[8,128], index: 7, kind: output, shape index: {}]
  %s8 = sld [smem:[#allocation0]]
  $region46: #{deep_qnetwork_forward.1} parent=0
    _
  %s10 = ssub.s32 1, %s8
  %s11 = scalar_select 0, %s10, %s8
  $region1: #{deep_qnetwork_forward.1} parent=0
    #allocation2 [shape = 'u8[32768]{0}', space=vmem, size = 0x8000, scoped, tag = 'input window, operand 3, single buffered']
    #allocation3 [shape = 's32[1]{0}', space=sflag, size = 0x4, scoped, tag = 'scoped memory for deep_qnetwork_forward.1']
    #allocation4 [shape = 'u8[32768]{0}', space=vmem, size = 0x8000, scoped, tag = 'input window, operand 5, single buffered']
    #allocation5 [shape = 's32[1]{0}', space=sflag, size = 0x4, scoped, tag = 'scoped memory for deep_qnetwork_forward.1']
    %12 = vsyncpa [#allocation3], 0
    %13 = vsyncpa [#allocation5], 0
    // Predicated region
    $region2: #{deep_qnetwork_forward.1} parent=1 // pred_check
      _
    $region3: #{deep_qnetwork_forward.1} parent=1 // pred_check_branch
      %15 = sbr.rel (0) target = $region5
    $region4: #{deep_qnetwork_forward.1} parent=1 // pred_region
      _
    $region5: #{deep_qnetwork_forward.1} parent=1 // pred_fallthru
      _
    // Predicated region
    $region6: #{deep_qnetwork_forward.1} parent=1 // pred_check
      _
    $region7: #{deep_qnetwork_forward.1} parent=1 // pred_check_branch
      %17 = sbr.rel (0) target = $region9
    $region8: #{deep_qnetwork_forward.1} parent=1 // pred_region
      _
    $region9: #{deep_qnetwork_forward.1} parent=1 // pred_fallthru
      _
    // Predicated region
    $region10: #{deep_qnetwork_forward.1} parent=1 // pred_check
      _
    $region11: #{deep_qnetwork_forward.1} parent=1 // pred_check_branch
      %19 = sbr.rel (0) target = $region13
    $region12: #{deep_qnetwork_forward.1} parent=1 // pred_region
      _
    $region13: #{deep_qnetwork_forward.1} parent=1 // pred_fallthru
      _
    // Predicated region
    $region14: #{deep_qnetwork_forward.1} parent=1 // pred_check
      _
    $region15: #{deep_qnetwork_forward.1} parent=1 // pred_check_branch
      %21 = sbr.rel (0) target = $region17
    $region16: #{deep_qnetwork_forward.1} parent=1 // pred_region
      %s23 = ssub.s32 1024, 1024
      %24 = vsyncadd [#allocation3], %s23
      %s25 = sshll.u32 [#allocation2], 4
      %s26 = int_to_ptr.vmem [resolvable:$true] %s25
      %31 = dma.hbm_to_vmem [thread:$0]  %s3, 1024, %s26, [#allocation3], 64, 64, 4
    $region17: #{deep_qnetwork_forward.1} parent=1 // pred_fallthru
      _
    // Predicated region
    $region18: #{deep_qnetwork_forward.1} parent=1 // pred_check
      _
    $region19: #{deep_qnetwork_forward.1} parent=1 // pred_check_branch
      %33 = sbr.rel (0) target = $region21
    $region20: #{deep_qnetwork_forward.1} parent=1 // pred_region
      _
    $region21: #{deep_qnetwork_forward.1} parent=1 // pred_fallthru
      _
    // Predicated region
    $region22: #{deep_qnetwork_forward.1} parent=1 // pred_check
      _
    $region23: #{deep_qnetwork_forward.1} parent=1 // pred_check_branch
      %35 = sbr.rel (0) target = $region25
    $region24: #{deep_qnetwork_forward.1} parent=1 // pred_region
      %s37 = ssub.s32 1024, 1024
      %38 = vsyncadd [#allocation5], %s37
      %s39 = sshll.u32 [#allocation4], 4
      %s40 = int_to_ptr.vmem [resolvable:$true] %s39
      %45 = dma.hbm_to_vmem [thread:$0]  %s5, 1024, %s40, [#allocation5], 64, 64, 4
    $region25: #{deep_qnetwork_forward.1} parent=1 // pred_fallthru
      _
    // Predicated region
    $region26: #{deep_qnetwork_forward.1} parent=1 // pred_check
      _
    $region27: #{deep_qnetwork_forward.1} parent=1 // pred_check_branch
      %47 = sbr.rel (0) target = $region29
    $region28: #{deep_qnetwork_forward.1} parent=1 // pred_region
      _
    $region29: #{deep_qnetwork_forward.1} parent=1 // pred_fallthru
      _
    // Predicated region
    $region30: #{deep_qnetwork_forward.1} parent=1 // pred_check
      _
    $region31: #{deep_qnetwork_forward.1} parent=1 // pred_check_branch
      %49 = sbr.rel (0) target = $region33
    $region32: #{deep_qnetwork_forward.1} parent=1 // pred_region
      %50 = dma.done [#allocation3], 1024
    $region33: #{deep_qnetwork_forward.1} parent=1 // pred_fallthru
      _
    // Predicated region
    $region34: #{deep_qnetwork_forward.1} parent=1 // pred_check
      _
    $region35: #{deep_qnetwork_forward.1} parent=1 // pred_check_branch
      %52 = sbr.rel (0) target = $region37
    $region36: #{deep_qnetwork_forward.1} parent=1 // pred_region
      %53 = dma.done [#allocation5], 1024
    $region37: #{deep_qnetwork_forward.1} parent=1 // pred_fallthru
      _
    %v55 = vld [vmem:[%s0] sm:$0xf]
    %v56 = vld [vmem:[%s1] sm:$0xf]
    %v57 = vld [vmem:[%s2] sm:$0x1]
    %v59 = vlaneseq
    %v60 = vshrl.u32 %v59, 7
    %v61 = vsub.s32 0, %v60
    %v62 = vrot.slane %v57, %v61
    %vm64 = vcmask 64512
    %v66 = vsel %vm64, %v55, 0
    %vm68 = vcmask 1043456
    %v70 = vsel %vm68, %v56, 0
    %72 = vmatprep.subr.bf16.mxu0 0
    %73 = vmatpush1.bf16.msra.mxu0 0
    %74 = vmatprep.subr.bf16.mxu0 0
    %75 = vmatpush1.bf16.msra.mxu0 0
    %76 = vmatprep.subr.bf16.mxu0 0
    %77 = vmatpush1.bf16.msra.mxu0 0
    %78 = vmatprep.subr.bf16.mxu0 0
    %79 = vmatpush1.bf16.msra.mxu0 0
    %80 = vmatprep.subr.bf16.mxu0 0
    %81 = vmatpush1.bf16.msra.mxu0 0
    %82 = vmatprep.subr.bf16.mxu0 0
    %83 = vmatpush1.bf16.msra.mxu0 0
    %84 = vmatprep.subr.bf16.mxu0 0
    %85 = vmatpush1.bf16.msra.mxu0 0
    %86 = vmatprep.subr.bf16.mxu0 0
    %87 = vmatpush1.bf16.msra.mxu0 %v70
    %88 = vmatprep.subr.bf16.mxu0 0
    %89 = vmatpush2.bf16.msra.mxu0 0
    %90 = vmatprep.subr.bf16.mxu0 0
    %91 = vmatpush2.bf16.msra.mxu0 0
    %92 = vmatprep.subr.bf16.mxu0 0
    %93 = vmatpush2.bf16.msra.mxu0 0
    %94 = vmatprep.subr.bf16.mxu0 0
    %95 = vmatpush2.bf16.msra.mxu0 0
    %96 = vmatprep.subr.bf16.mxu0 0
    %97 = vmatpush2.bf16.msra.mxu0 0
    %98 = vmatprep.subr.bf16.mxu0 0
    %99 = vmatpush2.bf16.msra.mxu0 0
    %100 = vmatprep.subr.bf16.mxu0 0
    %101 = vmatpush2.bf16.msra.mxu0 0
    %102 = vmatprep.subr.bf16.mxu0 0
    %103 = vmatpush2.bf16.msra.mxu0 0
    %104 = vmatprep.mubr.bf16.mxu0 0
    %105 = vmatmul.mubr.bf16.gmra.mxu0 %v66
    %v106 = vpop.f32.mrf.mxu0
    %v107 = vadd.f32 %v62, %v106
    %v108 = vpop.f32.mrf.mxu0
    %v109 = vpop.f32.mrf.mxu0
    %v110 = vpop.f32.mrf.mxu0
    %111 = vdwg.mxu0
    %v112 = vmax.f32 %v107, 0.0
    %v113 = vpack.c.bf16 %v112, %v112
    %v114 = vld [vmem:[#allocation2] sm:$0xf]
    %v115 = vld [vmem:[#allocation2 + $0x4] sm:$0xf]
    %v116 = vld [vmem:[#allocation2 + $0x8] sm:$0xf]
    %v117 = vld [vmem:[#allocation2 + $0xc] sm:$0xf]
    %v118 = vld [vmem:[#allocation2 + $0x10] sm:$0xf]
    %v119 = vld [vmem:[#allocation2 + $0x14] sm:$0xf]
    %v120 = vld [vmem:[#allocation2 + $0x18] sm:$0xf]
    %v121 = vld [vmem:[#allocation2 + $0x1c] sm:$0xf]
    %v122 = vld [vmem:[#allocation2 + $0x20] sm:$0xf]
    %v123 = vld [vmem:[#allocation2 + $0x24] sm:$0xf]
    %v124 = vld [vmem:[#allocation2 + $0x28] sm:$0xf]
    %v125 = vld [vmem:[#allocation2 + $0x2c] sm:$0xf]
    %v126 = vld [vmem:[#allocation2 + $0x30] sm:$0xf]
    %v127 = vld [vmem:[#allocation2 + $0x34] sm:$0xf]
    %v128 = vld [vmem:[#allocation2 + $0x38] sm:$0xf]
    %v129 = vld [vmem:[#allocation2 + $0x3c] sm:$0xf]
    %v130 = vld [vmem:[%s4] sm:$0x1]
    %v132 = vlaneseq
    %v133 = vshrl.u32 %v132, 7
    %v134 = vsub.s32 0, %v133
    %v135 = vrot.slane %v130, %v134
    %v153 = vunpack.c.l.b16 %v114
    %v154 = vunpack.c.l.b16 %v115
    %v155 = vunpack.c.l.b16 %v116
    %v156 = vunpack.c.l.b16 %v117
    %v157 = vunpack.c.l.b16 %v118
    %v158 = vunpack.c.l.b16 %v119
    %v159 = vunpack.c.l.b16 %v120
    %v160 = vunpack.c.l.b16 %v121
    %v161 = vunpack.c.l.b16 %v122
    %v162 = vunpack.c.l.b16 %v123
    %v163 = vunpack.c.l.b16 %v124
    %v164 = vunpack.c.l.b16 %v125
    %v165 = vunpack.c.l.b16 %v126
    %v166 = vunpack.c.l.b16 %v127
    %v167 = vunpack.c.l.b16 %v128
    %v168 = vunpack.c.l.b16 %v129
    %v169 = vpack.c.b16 %v154, %v153
    %v170 = vpack.c.b16 %v156, %v155
    %v171 = vpack.c.b16 %v158, %v157
    %v172 = vpack.c.b16 %v160, %v159
    %v173 = vpack.c.b16 %v162, %v161
    %v174 = vpack.c.b16 %v164, %v163
    %v175 = vpack.c.b16 %v166, %v165
    %v176 = vpack.c.b16 %v168, %v167
    %185 = vmatprep.subr.bf16.mxu0 0
    %186 = vmatpush1.bf16.msra.mxu0 %v176
    %187 = vmatprep.subr.bf16.mxu0 0
    %188 = vmatpush1.bf16.msra.mxu0 %v175
    %189 = vmatprep.subr.bf16.mxu0 0
    %190 = vmatpush1.bf16.msra.mxu0 %v174
    %191 = vmatprep.subr.bf16.mxu0 0
    %192 = vmatpush1.bf16.msra.mxu0 %v173
    %193 = vmatprep.subr.bf16.mxu0 0
    %194 = vmatpush1.bf16.msra.mxu0 %v172
    %195 = vmatprep.subr.bf16.mxu0 0
    %196 = vmatpush1.bf16.msra.mxu0 %v171
    %197 = vmatprep.subr.bf16.mxu0 0
    %198 = vmatpush1.bf16.msra.mxu0 %v170
    %199 = vmatprep.subr.bf16.mxu0 0
    %200 = vmatpush1.bf16.msra.mxu0 %v169
    %201 = vmatprep.subr.bf16.mxu0 0
    %202 = vmatpush2.bf16.msra.mxu0 0
    %203 = vmatprep.subr.bf16.mxu0 0
    %204 = vmatpush2.bf16.msra.mxu0 0
    %205 = vmatprep.subr.bf16.mxu0 0
    %206 = vmatpush2.bf16.msra.mxu0 0
    %207 = vmatprep.subr.bf16.mxu0 0
    %208 = vmatpush2.bf16.msra.mxu0 0
    %209 = vmatprep.subr.bf16.mxu0 0
    %210 = vmatpush2.bf16.msra.mxu0 0
    %211 = vmatprep.subr.bf16.mxu0 0
    %212 = vmatpush2.bf16.msra.mxu0 0
    %213 = vmatprep.subr.bf16.mxu0 0
    %214 = vmatpush2.bf16.msra.mxu0 0
    %215 = vmatprep.subr.bf16.mxu0 0
    %216 = vmatpush2.bf16.msra.mxu0 0
    %217 = vmatprep.mubr.bf16.mxu0 0
    %218 = vmatmul.mubr.bf16.gmra.mxu0 %v113
    %v219 = vpop.f32.mrf.mxu0
    %v220 = vadd.f32 %v135, %v219
    %v221 = vpop.f32.mrf.mxu0
    %v222 = vpop.f32.mrf.mxu0
    %v223 = vpop.f32.mrf.mxu0
    %224 = vdwg.mxu0
    %v225 = vmax.f32 %v220, 0.0
    %v226 = vpack.c.bf16 %v225, %v225
    %v227 = vld [vmem:[#allocation4] sm:$0xf]
    %v228 = vld [vmem:[#allocation4 + $0x4] sm:$0xf]
    %v229 = vld [vmem:[#allocation4 + $0x8] sm:$0xf]
    %v230 = vld [vmem:[#allocation4 + $0xc] sm:$0xf]
    %v231 = vld [vmem:[#allocation4 + $0x10] sm:$0xf]
    %v232 = vld [vmem:[#allocation4 + $0x14] sm:$0xf]
    %v233 = vld [vmem:[#allocation4 + $0x18] sm:$0xf]
    %v234 = vld [vmem:[#allocation4 + $0x1c] sm:$0xf]
    %v235 = vld [vmem:[#allocation4 + $0x20] sm:$0xf]
    %v236 = vld [vmem:[#allocation4 + $0x24] sm:$0xf]
    %v237 = vld [vmem:[#allocation4 + $0x28] sm:$0xf]
    %v238 = vld [vmem:[#allocation4 + $0x2c] sm:$0xf]
    %v239 = vld [vmem:[#allocation4 + $0x30] sm:$0xf]
    %v240 = vld [vmem:[#allocation4 + $0x34] sm:$0xf]
    %v241 = vld [vmem:[#allocation4 + $0x38] sm:$0xf]
    %v242 = vld [vmem:[#allocation4 + $0x3c] sm:$0xf]
    %v243 = vld [vmem:[%s6] sm:$0x1]
    %v245 = vlaneseq
    %v246 = vshrl.u32 %v245, 7
    %v247 = vsub.s32 0, %v246
    %v248 = vrot.slane %v243, %v247
    %v266 = vunpack.c.l.b16 %v227
    %v267 = vunpack.c.l.b16 %v228
    %v268 = vunpack.c.l.b16 %v229
    %v269 = vunpack.c.l.b16 %v230
    %v270 = vunpack.c.l.b16 %v231
    %v271 = vunpack.c.l.b16 %v232
    %v272 = vunpack.c.l.b16 %v233
    %v273 = vunpack.c.l.b16 %v234
    %v274 = vunpack.c.l.b16 %v235
    %v275 = vunpack.c.l.b16 %v236
    %v276 = vunpack.c.l.b16 %v237
    %v277 = vunpack.c.l.b16 %v238
    %v278 = vunpack.c.l.b16 %v239
    %v279 = vunpack.c.l.b16 %v240
    %v280 = vunpack.c.l.b16 %v241
    %v281 = vunpack.c.l.b16 %v242
    %v282 = vpack.c.b16 %v267, %v266
    %v283 = vpack.c.b16 %v269, %v268
    %v284 = vpack.c.b16 %v271, %v270
    %v285 = vpack.c.b16 %v273, %v272
    %v286 = vpack.c.b16 %v275, %v274
    %v287 = vpack.c.b16 %v277, %v276
    %v288 = vpack.c.b16 %v279, %v278
    %v289 = vpack.c.b16 %v281, %v280
    %298 = vmatprep.subr.bf16.mxu0 0
    %299 = vmatpush1.bf16.msra.mxu0 %v289
    %300 = vmatprep.subr.bf16.mxu0 0
    %301 = vmatpush1.bf16.msra.mxu0 %v288
    %302 = vmatprep.subr.bf16.mxu0 0
    %303 = vmatpush1.bf16.msra.mxu0 %v287
    %304 = vmatprep.subr.bf16.mxu0 0
    %305 = vmatpush1.bf16.msra.mxu0 %v286
    %306 = vmatprep.subr.bf16.mxu0 0
    %307 = vmatpush1.bf16.msra.mxu0 %v285
    %308 = vmatprep.subr.bf16.mxu0 0
    %309 = vmatpush1.bf16.msra.mxu0 %v284
    %310 = vmatprep.subr.bf16.mxu0 0
    %311 = vmatpush1.bf16.msra.mxu0 %v283
    %312 = vmatprep.subr.bf16.mxu0 0
    %313 = vmatpush1.bf16.msra.mxu0 %v282
    %314 = vmatprep.subr.bf16.mxu0 0
    %315 = vmatpush2.bf16.msra.mxu0 0
    %316 = vmatprep.subr.bf16.mxu0 0
    %317 = vmatpush2.bf16.msra.mxu0 0
    %318 = vmatprep.subr.bf16.mxu0 0
    %319 = vmatpush2.bf16.msra.mxu0 0
    %320 = vmatprep.subr.bf16.mxu0 0
    %321 = vmatpush2.bf16.msra.mxu0 0
    %322 = vmatprep.subr.bf16.mxu0 0
    %323 = vmatpush2.bf16.msra.mxu0 0
    %324 = vmatprep.subr.bf16.mxu0 0
    %325 = vmatpush2.bf16.msra.mxu0 0
    %326 = vmatprep.subr.bf16.mxu0 0
    %327 = vmatpush2.bf16.msra.mxu0 0
    %328 = vmatprep.subr.bf16.mxu0 0
    %329 = vmatpush2.bf16.msra.mxu0 0
    %330 = vmatprep.mubr.bf16.mxu0 0
    %331 = vmatmul.mubr.bf16.gmra.mxu0 %v226
    %v332 = vpop.f32.mrf.mxu0
    %v333 = vadd.f32 %v248, %v332
    %v334 = vpop.f32.mrf.mxu0
    %v335 = vpop.f32.mrf.mxu0
    %v336 = vpop.f32.mrf.mxu0
    %337 = vdwg.mxu0
    %338 = vst [vmem:[%s7] sm:$0xff] %v333
    // Predicated region
    $region38: #{deep_qnetwork_forward.1} parent=1 // pred_check
      _
    $region39: #{deep_qnetwork_forward.1} parent=1 // pred_check_branch
      %340 = sbr.rel (0) target = $region41
    $region40: #{deep_qnetwork_forward.1} parent=1 // pred_region
      _
    $region41: #{deep_qnetwork_forward.1} parent=1 // pred_fallthru
      _
    // Predicated region
    $region42: #{deep_qnetwork_forward.1} parent=1 // pred_check
      _
    $region43: #{deep_qnetwork_forward.1} parent=1 // pred_check_branch
      %342 = sbr.rel (0) target = $region45
    $region44: #{deep_qnetwork_forward.1} parent=1 // pred_region
      _
    $region45: #{deep_qnetwork_forward.1} parent=1 // pred_fallthru
      _
    %343 = vsyncpa [#allocation3], 1
    %344 = vsyncpa [#allocation5], 1

</llo_original>
